<compile_context>
chip_gen: v7x
topology: tpu7x:2x2x1
jax: 0.10.0
libtpu: 0.0.40
codegen_flags: <defaults>
</compile_context>

<pallas_src>
import functools
import math

import jax
import jax.numpy as jnp
from jax.experimental import pallas as pl
from jax.experimental.pallas import tpu as pltpu


def build_pe_table(d_model: int, max_len: int) -> jnp.ndarray:
    """PE table, identical math to the PyTorch __init__ (sin-only, per spec)."""
    position = jnp.arange(max_len, dtype=jnp.float32)[:, None]            # (L, 1)
    div_term = jnp.exp(
        jnp.arange(0, d_model, dtype=jnp.float32)
        * (-math.log(10000.0) / d_model)
    )                                                                     # (D,)
    pe = jnp.sin(position * div_term)                                     # (L, D)
    return jnp.transpose(pe, (1, 0))[None, :, :]                          # (1, D, L)


# ----------------------------------------------------------------------------
# Chip-aware tiling parameters.
# ----------------------------------------------------------------------------
@functools.lru_cache(maxsize=1)
def _chip_params():
    """Returns (target_block_bytes, vmem_limit_bytes_or_None, two_tensorcores)."""
    vmem = 0
    try:
        info = pltpu.get_tpu_info()
        vmem = int(getattr(info, "vmem_capacity_bytes", 0) or 0)
    except Exception:
        vmem = 0
    if vmem >= (96 << 20):          # v5e / v6e: 128 MiB physical VMEM, 1 TC
        return 6 << 20, 64 << 20, False
    if vmem > 0:                    # v7x-like: 64 MiB VMEM per TC, 2 TCs
        return 6 << 20, 48 << 20, True
    # Unknown chip: stay under every scoped-VMEM default, no megacore tricks.
    return 2 << 20, None, False


def _choose_tiles(B, D, L, itemsize, target_block_bytes, two_cores):
    """Pick (TB, TL): lane-dense, TL grown before TB, divisor-snapped blocks."""
    # --- TL first: L is the only HBM-contiguous axis of x, so longer TL means
    # fewer, longer DMA bursts.  Use full L whenever a (1, D, L) block fits.
    max_tl = max(128, target_block_bytes // (D * itemsize))
    if L <= max_tl:
        tl = L                                  # full extent: legal, no padding
    else:
        tl = (max_tl // 128) * 128              # lane-dense multiple of 128
        cand = tl                               # snap to a divisor of L when it
        while cand >= max(128, tl // 2):        # costs < 2x the step count
            if L % cand == 0:
                tl = cand
                break
            cand -= 128

    # --- TB fills the remaining block budget.
    row_bytes = D * tl * itemsize
    tb = max(1, min(B, target_block_bytes // row_bytes))
    div = next((c for c in range(tb, 0, -1) if B % c == 0), 1)
    if 2 * div >= tb:                           # snap to a divisor of B when cheap
        tb = div

    # --- Megacore: only a 2-TensorCore chip benefits from splitting a
    # single-step grid; on 1-TC chips the grid is a serial loop.
    if two_cores and B >= 2:
        steps = pl.cdiv(B, tb) * pl.cdiv(L, tl)
        if steps < 2:
            tb = (B + 1) // 2                   # split batch across both cores
        elif steps % 2 == 1 and steps < 8:
            if tb > 1:
                tb = (tb + 1) // 2              # roughly balance the two cores
            elif tl > 128 and tl % 256 == 0:
                tl //= 2
    return tb, tl


def _compiler_params(n_grid_axes, vmem_limit):
    kwargs = dict(dimension_semantics=("parallel",) * n_grid_axes)
    if vmem_limit is not None:
        kwargs["vmem_limit_bytes"] = int(vmem_limit)
    return pltpu.CompilerParams(**kwargs)


# ----------------------------------------------------------------------------
# Kernels.
# ----------------------------------------------------------------------------
def _pe_add_kernel(x_ref, pe_ref, o_ref):
    # x/o: (TB, D, TL) tiles; pe: (1, D, TL) tile, resident across the inner
    # batch grid axis.  Pure streaming add -> HBM-bandwidth bound.
    o_ref[...] = x_ref[...] + pe_ref[...]


def _pe_fused_kernel(div_ref, x_ref, o_ref):
    # Small-batch path: rebuild the PE tile in-register instead of streaming it.
    # div_ref: (D, 1) f32; x/o: (TB, D, TL).
    _, d, tl = x_ref.shape
    l0 = (pl.program_id(0) * tl).astype(jnp.float32)          # L-tile offset
    pos = jax.lax.broadcasted_iota(jnp.int32, (d, tl), 1).astype(jnp.float32) + l0
    pe = jnp.sin(pos * div_ref[...])                           # (D, TL), EUP sin
    o_ref[...] = (x_ref[...].astype(jnp.float32) + pe[None, :, :]).astype(o_ref.dtype)


# ----------------------------------------------------------------------------
# pallas_call wrappers.
# ----------------------------------------------------------------------------
@jax.jit
def _pe_add_table(x, pe):
    B, D, L = x.shape
    pe = pe.astype(x.dtype)                     # halve table bytes for bf16 x
    target, vmem_limit, two_cores = _chip_params()
    tb, tl = _choose_tiles(B, D, L, jnp.dtype(x.dtype).itemsize, target, two_cores)
    n_b, n_l = pl.cdiv(B, tb), pl.cdiv(L, tl)
    return pl.pallas_call(
        _pe_add_kernel,
        out_shape=jax.ShapeDtypeStruct((B, D, L), x.dtype),
        grid_spec=pltpu.PrefetchScalarGridSpec(
            num_scalar_prefetch=0,
            # Batch innermost: pe's block index is constant across it, so its
            # tile stays resident and is not re-DMA'd every step.
            grid=(n_l, n_b),
            in_specs=[
                pl.BlockSpec((tb, D, tl), lambda j, b: (b, 0, j)),
                pl.BlockSpec((1, D, tl), lambda j, b: (0, 0, j)),   # bcast over B
            ],
            out_specs=pl.BlockSpec((tb, D, tl), lambda j, b: (b, 0, j)),
        ),
        compiler_params=_compiler_params(2, vmem_limit),
    )(x, pe)


@jax.jit
def _pe_add_fused(x, div_col):
    B, D, L = x.shape
    target, vmem_limit, two_cores = _chip_params()
    tb, tl = _choose_tiles(B, D, L, jnp.dtype(x.dtype).itemsize, target, two_cores)
    n_b, n_l = pl.cdiv(B, tb), pl.cdiv(L, tl)
    return pl.pallas_call(
        _pe_fused_kernel,
        out_shape=jax.ShapeDtypeStruct((B, D, L), x.dtype),
        grid_spec=pltpu.PrefetchScalarGridSpec(
            num_scalar_prefetch=0,
            grid=(n_l, n_b),
            in_specs=[
                pl.BlockSpec((D, 1), lambda j, b: (0, 0)),          # tiny, resident
                pl.BlockSpec((tb, D, tl), lambda j, b: (b, 0, j)),
            ],
            out_specs=pl.BlockSpec((tb, D, tl), lambda j, b: (b, 0, j)),
        ),
        compiler_params=_compiler_params(2, vmem_limit),
    )(div_col, x)


class PositionalEncoder:
    """Pallas-TPU equivalent of the PyTorch PositionalEncoder module."""

    def __init__(self, d_model: int, max_len: int):
        self.d_model, self.max_len = d_model, max_len
        self.pe = build_pe_table(d_model, max_len)                        # (1, D, L)
        self.div = jnp.exp(
            jnp.arange(d_model, dtype=jnp.float32)
            * (-math.log(10000.0) / d_model)
        )[:, None]                                                        # (D, 1)

    def __call__(self, x: jnp.ndarray) -> jnp.ndarray:
        B, D, L = x.shape
        assert (D, L) == (self.d_model, self.max_len), (x.shape, (self.d_model, self.max_len))
        if B <= 2:
            # Small batch: regenerate PE in-kernel (idle EUP -> free sin),
            # removing the whole (1, D, L) table read from HBM.
            return _pe_add_fused(x, self.div)
        return _pe_add_table(x, self.pe)


# Functional entry point kept for convenience (pe must be build_pe_table's output).
def positional_encoder(x: jnp.ndarray, pe: jnp.ndarray) -> jnp.ndarray:
    B, D, L = x.shape
    assert pe.shape == (1, D, L), (pe.shape, (1, D, L))
    return _pe_add_table(x, pe)


if __name__ == "__main__":
    # Case 1: small shapes consistent with the module (batch, d_model, max_len).
    # B <= 2 -> fused in-kernel PE generation path.
    d_model, max_len, batch = 32, 128, 2
    key = jax.random.PRNGKey(0)
    x = jax.random.normal(key, (batch, d_model, max_len), dtype=jnp.float32)

    enc = PositionalEncoder(d_model, max_len)
    out = jax.block_until_ready(enc(x))

    ref = x + jnp.broadcast_to(enc.pe, x.shape)
    assert out.shape == (batch, d_model, max_len)
    # In-kernel EUP sin may differ from the XLA-built table by a few ulp.
    assert jnp.allclose(out, ref, atol=1e-5), "mismatch vs reference (fused path)"

    # Case 2: B > 2 -> table-streaming path, with uneven batch tiling possible.
    d2, l2, b2 = 16, 384, 5
    key2 = jax.random.PRNGKey(0)
    x2 = jax.random.normal(key2, (b2, d2, l2), dtype=jnp.float32)
    enc2 = PositionalEncoder(d2, l2)
    out2 = jax.block_until_ready(enc2(x2))
    ref2 = x2 + jnp.broadcast_to(enc2.pe, x2.shape)
    assert jnp.allclose(out2, ref2, atol=1e-6), "mismatch vs reference (table path)"

    print("KERNEL_OK")
</pallas_src>

<mosaic_0001>
module attributes {stable_mosaic.version = 11 : i64} {
  func.func @_pe_fused_kernel(%arg0: i32, %arg1: i32, %arg2: memref<32x1xf32, #tpu.memory_space<vmem>>, %arg3: memref<2x32x128xf32, #tpu.memory_space<vmem>>, %arg4: memref<2x32x128xf32, #tpu.memory_space<vmem>>) attributes {dimension_semantics = [#tpu.dimension_semantics<parallel>, #tpu.dimension_semantics<parallel>], iteration_bounds = array<i64: 1, 1>, scalar_prefetch = 0 : i64, scratch_operands = 0 : i64, tpu.core_type = #tpu.core_type<tc>, window_params = [{pipeline_mode = #tpu.pipeline_mode<synchronous>, transform_indices = @transform_0, window_bounds = array<i64: 32, 1>}, {transform_indices = @transform_1, window_bounds = array<i64: 2, 32, 128>}, {transform_indices = @transform_2, window_bounds = array<i64: 2, 32, 128>}]} {
    %c128_i32 = arith.constant 128 : i32
    %0 = arith.muli %arg0, %c128_i32 : i32
    %1 = arith.sitofp %0 : i32 to f32
    %2 = tpu.iota {dimensions = array<i32: 1>} : vector<32x128xi32>
    %3 = arith.sitofp %2 : vector<32x128xi32> to vector<32x128xf32>
    %4 = vector.broadcast %1 : f32 to vector<32x128xf32>
    %5 = arith.addf %3, %4 : vector<32x128xf32>
    %c0 = arith.constant 0 : index
    %c0_0 = arith.constant 0 : index
    %6 = vector.load %arg2[%c0, %c0_0] : memref<32x1xf32, #tpu.memory_space<vmem>>, vector<32x1xf32>
    %7 = vector.broadcast %6 : vector<32x1xf32> to vector<32x128xf32>
    %8 = arith.mulf %5, %7 : vector<32x128xf32>
    %9 = math.sin %8 : vector<32x128xf32>
    %c0_1 = arith.constant 0 : index
    %c0_2 = arith.constant 0 : index
    %c0_3 = arith.constant 0 : index
    %10 = vector.load %arg3[%c0_1, %c0_2, %c0_3] : memref<2x32x128xf32, #tpu.memory_space<vmem>>, vector<2x32x128xf32>
    %11 = vector.shape_cast %9 : vector<32x128xf32> to vector<1x32x128xf32>
    %12 = vector.broadcast %11 : vector<1x32x128xf32> to vector<2x32x128xf32>
    %13 = arith.addf %10, %12 : vector<2x32x128xf32>
    %c0_4 = arith.constant 0 : index
    %c0_5 = arith.constant 0 : index
    %c0_6 = arith.constant 0 : index
    %14 = vector.load %arg4[%c0_4, %c0_5, %c0_6] : memref<2x32x128xf32, #tpu.memory_space<vmem>>, vector<2x32x128xf32>
    tpu.vector_store %arg4[%c0_4, %c0_5, %c0_6], %13 {strides = array<i32>} : memref<2x32x128xf32, #tpu.memory_space<vmem>>, vector<2x32x128xf32>,
    return
  }
  func.func @transform_0(%arg0: i32, %arg1: i32) -> (i32, i32) {
    %c0_i32 = arith.constant 0 : i32
    %c0_i32_0 = arith.constant 0 : i32
    %c0_i32_1 = arith.constant 0 : i32
    return %c0_i32, %c0_i32_0 : i32, i32
  }
  func.func @transform_1(%arg0: i32, %arg1: i32) -> (i32, i32, i32) {
    %c0_i32 = arith.constant 0 : i32
    %c0_i32_0 = arith.constant 0 : i32
    return %arg1, %c0_i32, %arg0 : i32, i32, i32
  }
  func.func @transform_2(%arg0: i32, %arg1: i32) -> (i32, i32, i32) {
    %c0_i32 = arith.constant 0 : i32
    %c0_i32_0 = arith.constant 0 : i32
    return %arg1, %c0_i32, %arg0 : i32, i32, i32
  }
}

</mosaic_0001>

<llo_original>
// kernel: _pe_add_fused.1
$region0: #{_pe_add_fused.1}
  #allocation0 [shape = 'u32[]', space=smem, size = 0x4, offset = 0x4, fixed_abs, tag = 'smem constant byte address 0x4 - core index']
  #allocation1 [shape = 'u32[144,128]{1,0:T(1,128)}', space=vmem, size = 0x12000, scoped, tag = 'internal scratch']
  %s0 = inlined_call_operand.vmem [shape: f32[32,1], index: 0, kind: input, shape index: {}]
  %s1 = inlined_call_operand.hbm [shape: f32[2,32,128], index: 1, kind: input, shape index: {}]
  %s2 = inlined_call_operand.hbm [shape: f32[2,32,128], index: 2, kind: output, shape index: {}]
  %s3 = sld [smem:[#allocation0]]
  $region22: #{_pe_add_fused.1} parent=0
    _
  %s5 = ssub.s32 1, %s3
  %s6 = scalar_select 0, %s5, %s3
  $region1: #{_pe_add_fused.1} parent=0
    #allocation2 [shape = 'u8[32768]{0}', space=vmem, size = 0x8000, scoped, tag = 'input window, operand 1, single buffered']
    #allocation3 [shape = 's32[1]{0}', space=sflag, size = 0x4, scoped, tag = 'scoped memory for _pe_add_fused.1']
    #allocation4 [shape = 's32[1]{0}', space=sflag, size = 0x4, scoped, tag = 'scoped memory for _pe_add_fused.1']
    #allocation5 [shape = 'u8[32768]{0}', space=vmem, size = 0x8000, scoped, tag = 'output window, operand 0, single buffered']
    %7 = vsyncpa [#allocation3], 0
    %8 = vsyncpa [#allocation4], 0
    // Predicated region
    $region2: #{_pe_add_fused.1} parent=1 // pred_check
      _
    $region3: #{_pe_add_fused.1} parent=1 // pred_check_branch
      %10 = sbr.rel (0) target = $region5
    $region4: #{_pe_add_fused.1} parent=1 // pred_region
      _
    $region5: #{_pe_add_fused.1} parent=1 // pred_fallthru
      _
    // Predicated region
    $region6: #{_pe_add_fused.1} parent=1 // pred_check
      _
    $region7: #{_pe_add_fused.1} parent=1 // pred_check_branch
      %12 = sbr.rel (0) target = $region9
    $region8: #{_pe_add_fused.1} parent=1 // pred_region
      %s14 = ssub.s32 1024, 1024
      %15 = vsyncadd [#allocation3], %s14
      %s16 = sshll.u32 [#allocation2], 4
      %s17 = int_to_ptr.vmem [resolvable:$true] %s16
      %22 = dma.hbm_to_vmem [thread:$0]  %s1, 1024, %s17, [#allocation3], 128, 128, 8
    $region9: #{_pe_add_fused.1} parent=1 // pred_fallthru
      _
    // Predicated region
    $region10: #{_pe_add_fused.1} parent=1 // pred_check
      _
    $region11: #{_pe_add_fused.1} parent=1 // pred_check_branch
      %24 = sbr.rel (0) target = $region13
    $region12: #{_pe_add_fused.1} parent=1 // pred_region
      %25 = dma.done [#allocation3], 1024
    $region13: #{_pe_add_fused.1} parent=1 // pred_fallthru
      _
    %s26 = smul.u32 0, 128
    %s27 = scvt.s32.f32 %s26
    %v28 = vlaneseq
    %v29 = vand.u32 %v28, 127
    %v30 = vcvt.s32.f32 %v29
    %v31 = vstv %s27
    %v32 = vadd.f32 %v30, %v31
    %v33 = vld [vmem:[%s0] sm:$0xff]
    %v34 = vld [vmem:[%s0 + $0x8] sm:$0xff]
    %v35 = vld [vmem:[%s0 + $0x10] sm:$0xff]
    %v36 = vld [vmem:[%s0 + $0x18] sm:$0xff]
    %38 = vset.pattern.permute.xlu0 0
    %39 = vperm.xlu0 %38, %v33
    %v40 = vpop.permute.xlu0 %39
    %43 = vset.pattern.permute.xlu0 0
    %44 = vperm.xlu0 %43, %v34
    %v45 = vpop.permute.xlu0 %44
    %48 = vset.pattern.permute.xlu0 0
    %49 = vperm.xlu0 %48, %v35
    %v50 = vpop.permute.xlu0 %49
    %53 = vset.pattern.permute.xlu0 0
    %54 = vperm.xlu0 %53, %v36
    %v55 = vpop.permute.xlu0 %54
    %v57 = vmul.f32 %v32, %v40
    %v58 = vmul.f32 %v32, %v45
    %v59 = vmul.f32 %v32, %v50
    %v60 = vmul.f32 %v32, %v55
    %v61 = vand.u32 2147483647, %v57
    %vm62 = vcmp.le.f32.partialorder %v61, 0.7853982
    %vm63 = vcmp.lt.s32.totalorder %v57, 0
    %v64 = vand.u32 %v57, 2139095040
    %v65 = vshrl.u32 %v64, 23
    %v66 = vsub.s32 %v65, 127
    %v67 = vand.u32 2147483647, %v57
    %v68 = vand.u32 %v67, 8388607
    %v69 = vor.u32 %v68, 8388608
    %v70 = vsub.s32 0, %v69
    %v71 = vadd.s32 %v66, 1
    %vm72 = vcmp.gt.s32.totalorder %v71, 0
    %v73 = vsel %vm72, %v71, 0
    %v74 = vshrl.u32 %v73, 5
    %v75 = vand.u32 %v73, 31
    %v76 = vsub.s32 32, %v75
    %v77 = vshrl.u32 683565275, %v76
    %v78 = vshll.u32 683565275, %v75
    %v79 = vshrl.u32 2475754826, %v76
    %v80 = vor.u32 %v78, %v79
    %v81 = vshll.u32 2475754826, %v75
    %v82 = vshrl.u32 2131351028, %v76
    %v83 = vor.u32 %v81, %v82
    %v84 = vshll.u32 2131351028, %v75
    %v85 = vshrl.u32 2102212464, %v76
    %v86 = vor.u32 %v84, %v85
    %v87 = vshll.u32 2102212464, %v75
    %v88 = vshrl.u32 920167782, %v76
    %v89 = vor.u32 %v87, %v88
    %v90 = vshll.u32 920167782, %v75
    %v91 = vshrl.u32 1326507024, %v76
    %v92 = vor.u32 %v90, %v91
    %vm93 = vcmp.lt.s32.totalorder %v74, 1
    %vm94 = vcmp.lt.s32.totalorder %v74, 2
    %vm95 = vcmp.lt.s32.totalorder %v74, 3
    %vm96 = vcmp.lt.s32.totalorder %v74, 4
    %v97 = vsel %vm93, %v77, %v80
    %v98 = vsel %vm96, %v86, 2102212464
    %v99 = vsel %vm95, %v83, %v98
    %v100 = vsel %vm94, %v97, %v99
    %v101 = vsel %vm93, %v80, %v83
    %v102 = vsel %vm96, %v89, 920167782
    %v103 = vsel %vm95, %v86, %v102
    %v104 = vsel %vm94, %v101, %v103
    %v105 = vsel %vm93, %v83, %v86
    %v106 = vsel %vm96, %v92, 1326507024
    %v107 = vsel %vm95, %v89, %v106
    %v108 = vsel %vm94, %v105, %v107
    %v109 = vshll.u32 %v69, 8
    %v110 = vmul.u32.u64.compose %v109, %v108
    %v111 = vextract.low.u32 %v110
    %v112 = vextract.high.u32 %v110
    %v113 = vmul.u32.u64.compose %v109, %v104
    %v114 = vextract.low.u32 %v113
    %v115 = vextract.high.u32 %v113
    %v116 = vmul.u32 %v109, %v100
    %v117 = vadd.s32 %v112, %v114
    %vm118 = vc.u32 %v112, %v114
    %v119 = vadd.s32 %v115, 1
    %v120 = vsel %vm118, %v119, %v115
    %v121 = vadd.s32 %v116, %v120
    %v122 = vadd.s32 %v121, 536870912
    %v123 = vshrl.u32 %v122, 30
    %v124 = vshll.u32 %v123, 30
    %v125 = vsub.s32 %v121, %v124
    %vm126 = vcmp.lt.s32.totalorder %v125, 0
    %v127 = vsub.s32 0, %v125
    %v128 = vsel %vm126, %v127, %v125
    %v129 = vclz %v128
    %v130 = vsub.s32 %v129, 2
    %vm131 = vcmp.gt.s32.totalorder 0, %v130
    %v132 = vsel %vm131, 0, %v130
    %v133 = vsub.s32 32, %v132
    %v134 = vshll.u32 %v125, %v132
    %v135 = vshrl.u32 %v117, %v133
    %v136 = vor.u32 %v134, %v135
    %v137 = vsub.s32 4294967266, %v132
    %v138 = vadd.s32 %v137, 127
    %v139 = vshll.u32 %v138, 23
    %v140 = vor.u32 4788187, %v139
    %v141 = vand.u32 2147483647, %v140
    %v143 = vcvt.s32.f32 %v136
    %v144 = vmul.f32 %v143, %v141
    %v145 = vxor.u32 %v144, 2147483648
    %v146 = vsel %vm63, %v145, %v144
    %v147 = vsub.s32 4, %v123
    %v148 = vsel %vm63, %v147, %v123
    %v149 = vsel %vm62, %v57, %v146
    %v150 = vsel %vm62, 0, %v148
    %v151 = vcosq.f32.pop %v149
    %v152 = vsinq.f32.pop %v149
    %vm153 = vweird.f32 %v57
    %v154 = vadd.s32 %v150, 3
    %v155 = vand.u32 %v154, 3
    %vm156 = vcmp.lt.s32.totalorder %v155, 2
    %vm157 = vcmp.eq.s32.totalorder %v155, 0
    %v158 = vxor.u32 %v152, 2147483648
    %v159 = vsel %vm157, %v151, %v158
    %vm160 = vcmp.eq.s32.totalorder %v155, 2
    %v161 = vxor.u32 %v151, 2147483648
    %v162 = vsel %vm160, %v161, %v152
    %v163 = vsel %vm156, %v159, %v162
    %v164 = vsel %vm153, nan, %v163
    %v165 = vand.u32 2147483647, %v58
    %vm166 = vcmp.le.f32.partialorder %v165, 0.7853982
    %vm167 = vcmp.lt.s32.totalorder %v58, 0
    %v168 = vand.u32 %v58, 2139095040
    %v169 = vshrl.u32 %v168, 23
    %v170 = vsub.s32 %v169, 127
    %v171 = vand.u32 2147483647, %v58
    %v172 = vand.u32 %v171, 8388607
    %v173 = vor.u32 %v172, 8388608
    %v174 = vsub.s32 0, %v173
    %v175 = vadd.s32 %v170, 1
    %vm176 = vcmp.gt.s32.totalorder %v175, 0
    %v177 = vsel %vm176, %v175, 0
    %v178 = vshrl.u32 %v177, 5
    %v179 = vand.u32 %v177, 31
    %v180 = vsub.s32 32, %v179
    %v181 = vshrl.u32 683565275, %v180
    %v182 = vshll.u32 683565275, %v179
    %v183 = vshrl.u32 2475754826, %v180
    %v184 = vor.u32 %v182, %v183
    %v185 = vshll.u32 2475754826, %v179
    %v186 = vshrl.u32 2131351028, %v180
    %v187 = vor.u32 %v185, %v186
    %v188 = vshll.u32 2131351028, %v179
    %v189 = vshrl.u32 2102212464, %v180
    %v190 = vor.u32 %v188, %v189
    %v191 = vshll.u32 2102212464, %v179
    %v192 = vshrl.u32 920167782, %v180
    %v193 = vor.u32 %v191, %v192
    %v194 = vshll.u32 920167782, %v179
    %v195 = vshrl.u32 1326507024, %v180
    %v196 = vor.u32 %v194, %v195
    %vm197 = vcmp.lt.s32.totalorder %v178, 1
    %vm198 = vcmp.lt.s32.totalorder %v178, 2
    %vm199 = vcmp.lt.s32.totalorder %v178, 3
    %vm200 = vcmp.lt.s32.totalorder %v178, 4
    %v201 = vsel %vm197, %v181, %v184
    %v202 = vsel %vm200, %v190, 2102212464
    %v203 = vsel %vm199, %v187, %v202
    %v204 = vsel %vm198, %v201, %v203
    %v205 = vsel %vm197, %v184, %v187
    %v206 = vsel %vm200, %v193, 920167782
    %v207 = vsel %vm199, %v190, %v206
    %v208 = vsel %vm198, %v205, %v207
    %v209 = vsel %vm197, %v187, %v190
    %v210 = vsel %vm200, %v196, 1326507024
    %v211 = vsel %vm199, %v193, %v210
    %v212 = vsel %vm198, %v209, %v211
    %v213 = vshll.u32 %v173, 8
    %v214 = vmul.u32.u64.compose %v213, %v212
    %v215 = vextract.low.u32 %v214
    %v216 = vextract.high.u32 %v214
    %v217 = vmul.u32.u64.compose %v213, %v208
    %v218 = vextract.low.u32 %v217
    %v219 = vextract.high.u32 %v217
    %v220 = vmul.u32 %v213, %v204
    %v221 = vadd.s32 %v216, %v218
    %vm222 = vc.u32 %v216, %v218
    %v223 = vadd.s32 %v219, 1
    %v224 = vsel %vm222, %v223, %v219
    %v225 = vadd.s32 %v220, %v224
    %v226 = vadd.s32 %v225, 536870912
    %v227 = vshrl.u32 %v226, 30
    %v228 = vshll.u32 %v227, 30
    %v229 = vsub.s32 %v225, %v228
    %vm230 = vcmp.lt.s32.totalorder %v229, 0
    %v231 = vsub.s32 0, %v229
    %v232 = vsel %vm230, %v231, %v229
    %v233 = vclz %v232
    %v234 = vsub.s32 %v233, 2
    %vm235 = vcmp.gt.s32.totalorder 0, %v234
    %v236 = vsel %vm235, 0, %v234
    %v237 = vsub.s32 32, %v236
    %v238 = vshll.u32 %v229, %v236
    %v239 = vshrl.u32 %v221, %v237
    %v240 = vor.u32 %v238, %v239
    %v241 = vsub.s32 4294967266, %v236
    %v242 = vadd.s32 %v241, 127
    %v243 = vshll.u32 %v242, 23
    %v244 = vor.u32 4788187, %v243
    %v245 = vand.u32 2147483647, %v244
    %v247 = vcvt.s32.f32 %v240
    %v248 = vmul.f32 %v247, %v245
    %v249 = vxor.u32 %v248, 2147483648
    %v250 = vsel %vm167, %v249, %v248
    %v251 = vsub.s32 4, %v227
    %v252 = vsel %vm167, %v251, %v227
    %v253 = vsel %vm166, %v58, %v250
    %v254 = vsel %vm166, 0, %v252
    %v255 = vcosq.f32.pop %v253
    %v256 = vsinq.f32.pop %v253
    %vm257 = vweird.f32 %v58
    %v258 = vadd.s32 %v254, 3
    %v259 = vand.u32 %v258, 3
    %vm260 = vcmp.lt.s32.totalorder %v259, 2
    %vm261 = vcmp.eq.s32.totalorder %v259, 0
    %v262 = vxor.u32 %v256, 2147483648
    %v263 = vsel %vm261, %v255, %v262
    %vm264 = vcmp.eq.s32.totalorder %v259, 2
    %v265 = vxor.u32 %v255, 2147483648
    %v266 = vsel %vm264, %v265, %v256
    %v267 = vsel %vm260, %v263, %v266
    %v268 = vsel %vm257, nan, %v267
    %v269 = vand.u32 2147483647, %v59
    %vm270 = vcmp.le.f32.partialorder %v269, 0.7853982
    %vm271 = vcmp.lt.s32.totalorder %v59, 0
    %v272 = vand.u32 %v59, 2139095040
    %v273 = vshrl.u32 %v272, 23
    %v274 = vsub.s32 %v273, 127
    %v275 = vand.u32 2147483647, %v59
    %v276 = vand.u32 %v275, 8388607
    %v277 = vor.u32 %v276, 8388608
    %v278 = vsub.s32 0, %v277
    %v279 = vadd.s32 %v274, 1
    %vm280 = vcmp.gt.s32.totalorder %v279, 0
    %v281 = vsel %vm280, %v279, 0
    %v282 = vshrl.u32 %v281, 5
    %v283 = vand.u32 %v281, 31
    %v284 = vsub.s32 32, %v283
    %v285 = vshrl.u32 683565275, %v284
    %v286 = vshll.u32 683565275, %v283
    %v287 = vshrl.u32 2475754826, %v284
    %v288 = vor.u32 %v286, %v287
    %v289 = vshll.u32 2475754826, %v283
    %v290 = vshrl.u32 2131351028, %v284
    %v291 = vor.u32 %v289, %v290
    %v292 = vshll.u32 2131351028, %v283
    %v293 = vshrl.u32 2102212464, %v284
    %v294 = vor.u32 %v292, %v293
    %v295 = vshll.u32 2102212464, %v283
    %v296 = vshrl.u32 920167782, %v284
    %v297 = vor.u32 %v295, %v296
    %v298 = vshll.u32 920167782, %v283
    %v299 = vshrl.u32 1326507024, %v284
    %v300 = vor.u32 %v298, %v299
    %vm301 = vcmp.lt.s32.totalorder %v282, 1
    %vm302 = vcmp.lt.s32.totalorder %v282, 2
    %vm303 = vcmp.lt.s32.totalorder %v282, 3
    %vm304 = vcmp.lt.s32.totalorder %v282, 4
    %v305 = vsel %vm301, %v285, %v288
    %v306 = vsel %vm304, %v294, 2102212464
    %v307 = vsel %vm303, %v291, %v306
    %v308 = vsel %vm302, %v305, %v307
    %v309 = vsel %vm301, %v288, %v291
    %v310 = vsel %vm304, %v297, 920167782
    %v311 = vsel %vm303, %v294, %v310
    %v312 = vsel %vm302, %v309, %v311
    %v313 = vsel %vm301, %v291, %v294
    %v314 = vsel %vm304, %v300, 1326507024
    %v315 = vsel %vm303, %v297, %v314
    %v316 = vsel %vm302, %v313, %v315
    %v317 = vshll.u32 %v277, 8
    %v318 = vmul.u32.u64.compose %v317, %v316
    %v319 = vextract.low.u32 %v318
    %v320 = vextract.high.u32 %v318
    %v321 = vmul.u32.u64.compose %v317, %v312
    %v322 = vextract.low.u32 %v321
    %v323 = vextract.high.u32 %v321
    %v324 = vmul.u32 %v317, %v308
    %v325 = vadd.s32 %v320, %v322
    %vm326 = vc.u32 %v320, %v322
    %v327 = vadd.s32 %v323, 1
    %v328 = vsel %vm326, %v327, %v323
    %v329 = vadd.s32 %v324, %v328
    %v330 = vadd.s32 %v329, 536870912
    %v331 = vshrl.u32 %v330, 30
    %v332 = vshll.u32 %v331, 30
    %v333 = vsub.s32 %v329, %v332
    %vm334 = vcmp.lt.s32.totalorder %v333, 0
    %v335 = vsub.s32 0, %v333
    %v336 = vsel %vm334, %v335, %v333
    %v337 = vclz %v336
    %v338 = vsub.s32 %v337, 2
    %vm339 = vcmp.gt.s32.totalorder 0, %v338
    %v340 = vsel %vm339, 0, %v338
    %v341 = vsub.s32 32, %v340
    %v342 = vshll.u32 %v333, %v340
    %v343 = vshrl.u32 %v325, %v341
    %v344 = vor.u32 %v342, %v343
    %v345 = vsub.s32 4294967266, %v340
    %v346 = vadd.s32 %v345, 127
    %v347 = vshll.u32 %v346, 23
    %v348 = vor.u32 4788187, %v347
    %v349 = vand.u32 2147483647, %v348
    %v351 = vcvt.s32.f32 %v344
    %v352 = vmul.f32 %v351, %v349
    %v353 = vxor.u32 %v352, 2147483648
    %v354 = vsel %vm271, %v353, %v352
    %v355 = vsub.s32 4, %v331
    %v356 = vsel %vm271, %v355, %v331
    %v357 = vsel %vm270, %v59, %v354
    %v358 = vsel %vm270, 0, %v356
    %v359 = vcosq.f32.pop %v357
    %v360 = vsinq.f32.pop %v357
    %vm361 = vweird.f32 %v59
    %v362 = vadd.s32 %v358, 3
    %v363 = vand.u32 %v362, 3
    %vm364 = vcmp.lt.s32.totalorder %v363, 2
    %vm365 = vcmp.eq.s32.totalorder %v363, 0
    %v366 = vxor.u32 %v360, 2147483648
    %v367 = vsel %vm365, %v359, %v366
    %vm368 = vcmp.eq.s32.totalorder %v363, 2
    %v369 = vxor.u32 %v359, 2147483648
    %v370 = vsel %vm368, %v369, %v360
    %v371 = vsel %vm364, %v367, %v370
    %v372 = vsel %vm361, nan, %v371
    %v373 = vand.u32 2147483647, %v60
    %vm374 = vcmp.le.f32.partialorder %v373, 0.7853982
    %vm375 = vcmp.lt.s32.totalorder %v60, 0
    %v376 = vand.u32 %v60, 2139095040
    %v377 = vshrl.u32 %v376, 23
    %v378 = vsub.s32 %v377, 127
    %v379 = vand.u32 2147483647, %v60
    %v380 = vand.u32 %v379, 8388607
    %v381 = vor.u32 %v380, 8388608
    %v382 = vsub.s32 0, %v381
    %v383 = vadd.s32 %v378, 1
    %vm384 = vcmp.gt.s32.totalorder %v383, 0
    %v385 = vsel %vm384, %v383, 0
    %v386 = vshrl.u32 %v385, 5
    %v387 = vand.u32 %v385, 31
    %v388 = vsub.s32 32, %v387
    %v389 = vshrl.u32 683565275, %v388
    %v390 = vshll.u32 683565275, %v387
    %v391 = vshrl.u32 2475754826, %v388
    %v392 = vor.u32 %v390, %v391
    %v393 = vshll.u32 2475754826, %v387
    %v394 = vshrl.u32 2131351028, %v388
    %v395 = vor.u32 %v393, %v394
    %v396 = vshll.u32 2131351028, %v387
    %v397 = vshrl.u32 2102212464, %v388
    %v398 = vor.u32 %v396, %v397
    %v399 = vshll.u32 2102212464, %v387
    %v400 = vshrl.u32 920167782, %v388
    %v401 = vor.u32 %v399, %v400
    %v402 = vshll.u32 920167782, %v387
    %v403 = vshrl.u32 1326507024, %v388
    %v404 = vor.u32 %v402, %v403
    %vm405 = vcmp.lt.s32.totalorder %v386, 1
    %vm406 = vcmp.lt.s32.totalorder %v386, 2
    %vm407 = vcmp.lt.s32.totalorder %v386, 3
    %vm408 = vcmp.lt.s32.totalorder %v386, 4
    %v409 = vsel %vm405, %v389, %v392
    %v410 = vsel %vm408, %v398, 2102212464
    %v411 = vsel %vm407, %v395, %v410
    %v412 = vsel %vm406, %v409, %v411
    %v413 = vsel %vm405, %v392, %v395
    %v414 = vsel %vm408, %v401, 920167782
    %v415 = vsel %vm407, %v398, %v414
    %v416 = vsel %vm406, %v413, %v415
    %v417 = vsel %vm405, %v395, %v398
    %v418 = vsel %vm408, %v404, 1326507024
    %v419 = vsel %vm407, %v401, %v418
    %v420 = vsel %vm406, %v417, %v419
    %v421 = vshll.u32 %v381, 8
    %v422 = vmul.u32.u64.compose %v421, %v420
    %v423 = vextract.low.u32 %v422
    %v424 = vextract.high.u32 %v422
    %v425 = vmul.u32.u64.compose %v421, %v416
    %v426 = vextract.low.u32 %v425
    %v427 = vextract.high.u32 %v425
    %v428 = vmul.u32 %v421, %v412
    %v429 = vadd.s32 %v424, %v426
    %vm430 = vc.u32 %v424, %v426
    %v431 = vadd.s32 %v427, 1
    %v432 = vsel %vm430, %v431, %v427
    %v433 = vadd.s32 %v428, %v432
    %v434 = vadd.s32 %v433, 536870912
    %v435 = vshrl.u32 %v434, 30
    %v436 = vshll.u32 %v435, 30
    %v437 = vsub.s32 %v433, %v436
    %vm438 = vcmp.lt.s32.totalorder %v437, 0
    %v439 = vsub.s32 0, %v437
    %v440 = vsel %vm438, %v439, %v437
    %v441 = vclz %v440
    %v442 = vsub.s32 %v441, 2
    %vm443 = vcmp.gt.s32.totalorder 0, %v442
    %v444 = vsel %vm443, 0, %v442
    %v445 = vsub.s32 32, %v444
    %v446 = vshll.u32 %v437, %v444
    %v447 = vshrl.u32 %v429, %v445
    %v448 = vor.u32 %v446, %v447
    %v449 = vsub.s32 4294967266, %v444
    %v450 = vadd.s32 %v449, 127
    %v451 = vshll.u32 %v450, 23
    %v452 = vor.u32 4788187, %v451
    %v453 = vand.u32 2147483647, %v452
    %v455 = vcvt.s32.f32 %v448
    %v456 = vmul.f32 %v455, %v453
    %v457 = vxor.u32 %v456, 2147483648
    %v458 = vsel %vm375, %v457, %v456
    %v459 = vsub.s32 4, %v435
    %v460 = vsel %vm375, %v459, %v435
    %v461 = vsel %vm374, %v60, %v458
    %v462 = vsel %vm374, 0, %v460
    %v463 = vcosq.f32.pop %v461
    %v464 = vsinq.f32.pop %v461
    %vm465 = vweird.f32 %v60
    %v466 = vadd.s32 %v462, 3
    %v467 = vand.u32 %v466, 3
    %vm468 = vcmp.lt.s32.totalorder %v467, 2
    %vm469 = vcmp.eq.s32.totalorder %v467, 0
    %v470 = vxor.u32 %v464, 2147483648
    %v471 = vsel %vm469, %v463, %v470
    %vm472 = vcmp.eq.s32.totalorder %v467, 2
    %v473 = vxor.u32 %v463, 2147483648
    %v474 = vsel %vm472, %v473, %v464
    %v475 = vsel %vm468, %v471, %v474
    %v476 = vsel %vm465, nan, %v475
    %v477 = vld [vmem:[#allocation2] sm:$0xff]
    %v478 = vld [vmem:[#allocation2 + $0x8] sm:$0xff]
    %v479 = vld [vmem:[#allocation2 + $0x10] sm:$0xff]
    %v480 = vld [vmem:[#allocation2 + $0x18] sm:$0xff]
    %v481 = vld [vmem:[#allocation2 + $0x20] sm:$0xff]
    %v482 = vld [vmem:[#allocation2 + $0x28] sm:$0xff]
    %v483 = vld [vmem:[#allocation2 + $0x30] sm:$0xff]
    %v484 = vld [vmem:[#allocation2 + $0x38] sm:$0xff]
    %v485 = vadd.f32 %v477, %v164
    %v486 = vadd.f32 %v478, %v268
    %v487 = vadd.f32 %v479, %v372
    %v488 = vadd.f32 %v480, %v476
    %v489 = vadd.f32 %v481, %v164
    %v490 = vadd.f32 %v482, %v268
    %v491 = vadd.f32 %v483, %v372
    %v492 = vadd.f32 %v484, %v476
    %493 = vst [vmem:[#allocation5] sm:$0xff] %v485
    %494 = vst [vmem:[#allocation5 + $0x8] sm:$0xff] %v486
    %495 = vst [vmem:[#allocation5 + $0x10] sm:$0xff] %v487
    %496 = vst [vmem:[#allocation5 + $0x18] sm:$0xff] %v488
    %497 = vst [vmem:[#allocation5 + $0x20] sm:$0xff] %v489
    %498 = vst [vmem:[#allocation5 + $0x28] sm:$0xff] %v490
    %499 = vst [vmem:[#allocation5 + $0x30] sm:$0xff] %v491
    %500 = vst [vmem:[#allocation5 + $0x38] sm:$0xff] %v492
    // Predicated region
    $region14: #{_pe_add_fused.1} parent=1 // pred_check
      _
    $region15: #{_pe_add_fused.1} parent=1 // pred_check_branch
      %502 = sbr.rel (0) target = $region17
    $region16: #{_pe_add_fused.1} parent=1 // pred_region
      %s504 = ssub.s32 1024, 1024
      %505 = vsyncadd [#allocation4], %s504
      %s506 = sshll.u32 [#allocation5], 4
      %s507 = int_to_ptr.vmem [resolvable:$true] %s506
      %512 = dma.vmem_to_hbm [thread:$0]  %s507, 1024, %s2, [#allocation4], 128, 128, 8
    $region17: #{_pe_add_fused.1} parent=1 // pred_fallthru
      _
    // Predicated region
    $region18: #{_pe_add_fused.1} parent=1 // pred_check
      _
    $region19: #{_pe_add_fused.1} parent=1 // pred_check_branch
      %514 = sbr.rel (0) target = $region21
    $region20: #{_pe_add_fused.1} parent=1 // pred_region
      %515 = dma.done [#allocation4], 1024
    $region21: #{_pe_add_fused.1} parent=1 // pred_fallthru
      _
    %516 = vsyncpa [#allocation3], 1
    %517 = vsyncpa [#allocation4], 1

</llo_original>
